<compile_context>
chip_gen: v5e
topology: v5e:2x2
jax: 0.10.0
libtpu: 0.0.40
codegen_flags: <defaults>
</compile_context>

<pallas_src>
import functools

import jax
import jax.numpy as jnp
from jax.experimental import pallas as pl
from jax.experimental.pallas import tpu as pltpu


def _rmsnorm_kernel(x_ref, w_ref, o_ref, *, eps, inv_d, cast_before_mul):
    # x_ref: (tm, D), w_ref: (1, D), o_ref: (tm, D)
    xf = x_ref[...].astype(jnp.float32)
    # sum * (1/D) instead of mean: the divide folds into a constant multiply.
    var = jnp.sum(xf * xf, axis=-1, keepdims=True) * inv_d
    y = xf * jax.lax.rsqrt(var + eps)          # rsqrt -> EUP slot (free here)
    w = w_ref[...]
    if cast_before_mul:
        # torch semantics: cast the normalized hidden to the fp16/bf16 weight
        # dtype BEFORE multiplying by the weight (multiply happens in that dtype).
        o_ref[...] = (y.astype(w.dtype) * w).astype(o_ref.dtype)
    else:
        # weight was pre-cast to f32 once in the wrapper (no per-step cast).
        o_ref[...] = (y * w).astype(o_ref.dtype)


def _round_up(x, m):
    return (x + m - 1) // m * m


def _vmem_capacity_bytes():
    # 128 MiB on v5e/v6e, 64 MiB per TensorCore on v7x. Fall back conservatively.
    try:
        return int(pltpu.get_tpu_info().vmem_capacity_bytes)
    except Exception:
        return 64 * 1024 * 1024


def rms_normalize(hidden_states, weight, eps=1e-5, *, block_rows=None):
    """Pallas RMSNorm matching RMSNormalize.forward semantics.

    hidden_states: (..., D)
    weight:        (D,)
    """
    orig_shape = hidden_states.shape
    D = orig_shape[-1]
    x2d = hidden_states.reshape(-1, D)
    N = x2d.shape[0]

    # Output dtype rule from the torch module: the rsqrt promotion gives f32;
    # if the weight is fp16/bf16 the hidden is cast to the weight dtype before
    # the final multiply, so the result is the weight dtype.
    weight_is_half = weight.dtype in (jnp.float16, jnp.bfloat16)
    if weight_is_half:
        out_dtype = weight.dtype
        w2d = weight.reshape(1, D)                       # multiply in weight dtype
    else:
        out_dtype = jnp.result_type(jnp.float32, weight.dtype)
        w2d = weight.astype(jnp.float32).reshape(1, D)   # hoisted one-time cast

    in_bytes = jnp.dtype(x2d.dtype).itemsize
    out_bytes = jnp.dtype(out_dtype).itemsize
    # Sublane packing of a vreg: 8 rows for f32, 16 for bf16/f16, 32 for int8.
    packing = 32 // min(in_bytes, out_bytes)

    # Size the row tile so 2x double-buffered (input + output) blocks use most
    # of the scoped VMEM limit, which we raise explicitly (v5e default is only
    # 16 MiB). Leaves headroom for the resident weight block and scratch.
    vmem_cap = _vmem_capacity_bytes()
    vmem_limit = min(3 * vmem_cap // 4, 96 * 1024 * 1024)   # 96 MiB v5e/v6e, 48 MiB v7x
    data_budget = 2 * vmem_limit // 3
    bytes_per_row = 2 * D * (in_bytes + out_bytes)           # x2: double buffering
    tm_budget = max(packing, (data_budget // bytes_per_row) // packing * packing)

    if block_rows is not None:
        tm = _round_up(min(block_rows, N), packing)
    else:
        tm = min(tm_budget, _round_up(N, packing))
        # If everything fits in one tile but there are plenty of rows, split in
        # two so both v7x TensorCores get work (grid axis is "parallel").
        if N >= 4 * packing and pl.cdiv(N, tm) < 2:
            tm = _round_up(pl.cdiv(N, 2), packing)

    n_blocks = pl.cdiv(N, tm)
    n_pad = n_blocks * tm
    if n_pad != N:
        # Zero rows are safe: 0 * rsqrt(0 + eps) = 0 (no NaN), and they are
        # sliced away below. Far cheaper than shrinking tm for divisibility.
        x2d = jnp.pad(x2d, ((0, n_pad - N), (0, 0)))

    kernel = functools.partial(
        _rmsnorm_kernel,
        eps=float(eps),
        inv_d=1.0 / float(D),
        cast_before_mul=weight_is_half,
    )

    out2d = pl.pallas_call(
        kernel,
        out_shape=jax.ShapeDtypeStruct((n_pad, D), out_dtype),
        grid_spec=pltpu.PrefetchScalarGridSpec(
            num_scalar_prefetch=0,
            grid=(n_blocks,),
            in_specs=[
                pl.BlockSpec((tm, D), lambda i: (i, 0)),
                pl.BlockSpec((1, D), lambda i: (0, 0)),  # weight stays resident
            ],
            out_specs=pl.BlockSpec((tm, D), lambda i: (i, 0)),
        ),
        compiler_params=pltpu.CompilerParams(
            dimension_semantics=("parallel",),
            vmem_limit_bytes=vmem_limit,
        ),
    )(x2d, w2d)

    if n_pad != N:
        out2d = out2d[:N]
    return out2d.reshape(orig_shape)


def _reference(hidden_states, weight, eps=1e-5):
    # Pure-JAX reference mirroring the torch forward exactly.
    xf = hidden_states.astype(jnp.float32)
    var = jnp.mean(xf * xf, axis=-1, keepdims=True)
    h = hidden_states.astype(jnp.float32) * jax.lax.rsqrt(var + eps)
    if weight.dtype in (jnp.float16, jnp.bfloat16):
        h = h.astype(weight.dtype)
    return h * weight


if __name__ == "__main__":
    key = jax.random.PRNGKey(0)
    batch, seq, hidden = 2, 8, 128
    x = jax.random.normal(key, (batch, seq, hidden), dtype=jnp.float32)

    # f32 path: nn.Parameter(torch.ones(dim)) -> ones.
    w_f32 = jnp.ones((hidden,), dtype=jnp.float32)
    out = jax.block_until_ready(rms_normalize(x, w_f32, eps=1e-5))
    ref = _reference(x, w_f32, eps=1e-5)
    assert out.shape == x.shape
    assert out.dtype == ref.dtype
    assert jnp.allclose(out, ref, atol=1e-5, rtol=1e-5)

    # bf16 path: exercises the cast-before-multiply order and 16-row sublane
    # packing (the previous version only validated f32).
    x_bf16 = x.astype(jnp.bfloat16)
    w_bf16 = jnp.ones((hidden,), dtype=jnp.bfloat16)
    out_bf16 = jax.block_until_ready(rms_normalize(x_bf16, w_bf16, eps=1e-5))
    ref_bf16 = _reference(x_bf16, w_bf16, eps=1e-5)
    assert out_bf16.shape == x.shape
    assert out_bf16.dtype == jnp.bfloat16
    assert jnp.allclose(
        out_bf16.astype(jnp.float32), ref_bf16.astype(jnp.float32),
        atol=1e-2, rtol=1e-2,
    )

    print("KERNEL_OK")
</pallas_src>

<mosaic_0001>
module attributes {stable_mosaic.version = 11 : i64} {
  func.func @_rmsnorm_kernel(%arg0: i32, %arg1: memref<16x128xf32, #tpu.memory_space<vmem>>, %arg2: memref<1x128xf32, #tpu.memory_space<vmem>>, %arg3: memref<16x128xf32, #tpu.memory_space<vmem>>) attributes {dimension_semantics = [#tpu.dimension_semantics<parallel>], iteration_bounds = array<i64: 1>, scalar_prefetch = 0 : i64, scratch_operands = 0 : i64, tpu.core_type = #tpu.core_type<tc>, window_params = [{transform_indices = @transform_0, window_bounds = array<i64: 16, 128>}, {pipeline_mode = #tpu.pipeline_mode<synchronous>, transform_indices = @transform_1, window_bounds = array<i64: 1, 128>}, {transform_indices = @transform_2, window_bounds = array<i64: 16, 128>}]} {
    %c0 = arith.constant 0 : index
    %c0_0 = arith.constant 0 : index
    %0 = vector.load %arg1[%c0, %c0_0] : memref<16x128xf32, #tpu.memory_space<vmem>>, vector<16x128xf32>
    %1 = arith.mulf %0, %0 : vector<16x128xf32>
    %cst = arith.constant dense<0.000000e+00> : vector<16xf32>
    %2 = vector.multi_reduction <add>, %1, %cst [1] : vector<16x128xf32> to vector<16xf32>
    %3 = vector.shape_cast %2 : vector<16xf32> to vector<16x1xf32>
    %cst_1 = arith.constant 7.812500e-03 : f32
    %4 = vector.broadcast %cst_1 : f32 to vector<16x1xf32>
    %5 = arith.mulf %3, %4 : vector<16x1xf32>
    %cst_2 = arith.constant 9.99999974E-6 : f32
    %6 = vector.broadcast %cst_2 : f32 to vector<16x1xf32>
    %7 = arith.addf %5, %6 : vector<16x1xf32>
    %8 = math.rsqrt %7 : vector<16x1xf32>
    %9 = vector.broadcast %8 : vector<16x1xf32> to vector<16x128xf32>
    %10 = arith.mulf %0, %9 : vector<16x128xf32>
    %c0_3 = arith.constant 0 : index
    %c0_4 = arith.constant 0 : index
    %11 = vector.load %arg2[%c0_3, %c0_4] : memref<1x128xf32, #tpu.memory_space<vmem>>, vector<1x128xf32>
    %12 = vector.broadcast %11 : vector<1x128xf32> to vector<16x128xf32>
    %13 = arith.mulf %10, %12 : vector<16x128xf32>
    %c0_5 = arith.constant 0 : index
    %c0_6 = arith.constant 0 : index
    %14 = vector.load %arg3[%c0_5, %c0_6] : memref<16x128xf32, #tpu.memory_space<vmem>>, vector<16x128xf32>
    tpu.vector_store %arg3[%c0_5, %c0_6], %13 {strides = array<i32>} : memref<16x128xf32, #tpu.memory_space<vmem>>, vector<16x128xf32>,
    return
  }
  func.func @transform_0(%arg0: i32) -> (i32, i32) {
    %c0_i32 = arith.constant 0 : i32
    %c0_i32_0 = arith.constant 0 : i32
    return %arg0, %c0_i32 : i32, i32
  }
  func.func @transform_1(%arg0: i32) -> (i32, i32) {
    %c0_i32 = arith.constant 0 : i32
    %c0_i32_0 = arith.constant 0 : i32
    %c0_i32_1 = arith.constant 0 : i32
    return %c0_i32, %c0_i32_0 : i32, i32
  }
  func.func @transform_2(%arg0: i32) -> (i32, i32) {
    %c0_i32 = arith.constant 0 : i32
    %c0_i32_0 = arith.constant 0 : i32
    return %arg0, %c0_i32 : i32, i32
  }
}

</mosaic_0001>

<llo_original>
// kernel: tpu_custom_call.1
$region0: #{tpu_custom_call.1}
  #allocation0 [shape = 'u32[]', space=smem, size = 0x4, offset = 0x4, fixed_abs, tag = 'smem constant byte address 0x4 - core index']
  #allocation1 [shape = 'u32[72,128]{1,0:T(1,128)}', space=vmem, size = 0x9000, scoped, tag = 'internal scratch']
  %s0 = inlined_call_operand.hbm [shape: f32[16,128], index: 0, kind: input, shape index: {}]
  %s1 = inlined_call_operand.hbm [shape: f32[1,128], index: 1, kind: input, shape index: {}]
  %s2 = inlined_call_operand.hbm [shape: f32[16,128], index: 2, kind: output, shape index: {}]
  %s3 = sld [smem:[#allocation0]]
  $region26: #{tpu_custom_call.1} parent=0
    _
  %s5 = ssub.s32 1, %s3
  %s6 = scalar_select 0, %s5, %s3
  $region1: #{tpu_custom_call.1} parent=0
    #allocation2 [shape = 'u8[8192]{0}', space=vmem, size = 0x2000, scoped, tag = 'input window, operand 0, single buffered']
    #allocation3 [shape = 's32[1]{0}', space=sflag, size = 0x4, scoped, tag = 'scoped memory for tpu_custom_call.1']
    #allocation4 [shape = 's32[1]{0}', space=sflag, size = 0x4, scoped, tag = 'scoped memory for tpu_custom_call.1']
    #allocation5 [shape = 'u8[512]{0}', space=vmem, size = 0x400, scoped, tag = 'input window, operand 1, single buffered']
    #allocation6 [shape = 's32[1]{0}', space=sflag, size = 0x4, scoped, tag = 'scoped memory for tpu_custom_call.1']
    #allocation7 [shape = 'u8[8192]{0}', space=vmem, size = 0x2000, scoped, tag = 'output window, operand 0, single buffered']
    %7 = vsyncpa [#allocation3], 0
    %8 = vsyncpa [#allocation6], 0
    %9 = vsyncpa [#allocation4], 0
    // Predicated region
    $region2: #{tpu_custom_call.1} parent=1 // pred_check
      _
    $region3: #{tpu_custom_call.1} parent=1 // pred_check_branch
      %11 = sbr.rel (0) target = $region5
    $region4: #{tpu_custom_call.1} parent=1 // pred_region
      %13 = vsyncadd [#allocation3], 0
      %s14 = sshll.u32 %s0, 4
      %s15 = int_to_ptr.hbm [resolvable:$true] %s14
      %s16 = sshll.u32 [#allocation2], 4
      %s17 = int_to_ptr.vmem [resolvable:$true] %s16
      %22 = dma.hbm_to_vmem [thread:$0]  %s15, 256, %s17, [#allocation3], 128, 128, 8
    $region5: #{tpu_custom_call.1} parent=1 // pred_fallthru
      _
    // Predicated region
    $region6: #{tpu_custom_call.1} parent=1 // pred_check
      _
    $region7: #{tpu_custom_call.1} parent=1 // pred_check_branch
      %24 = sbr.rel (0) target = $region9
    $region8: #{tpu_custom_call.1} parent=1 // pred_region
      %26 = vsyncadd [#allocation6], 0
      %s28 = sshll.u32 %s1, 4
      %s29 = int_to_ptr.hbm [resolvable:$true] %s28
      %s30 = sshll.u32 [#allocation5], 4
      %s31 = int_to_ptr.vmem [resolvable:$true] %s30
      %33 = dma.hbm_to_vmem [thread:$0]  %s29, 16, %s31, [#allocation6]
    $region9: #{tpu_custom_call.1} parent=1 // pred_fallthru
      _
    // Predicated region
    $region10: #{tpu_custom_call.1} parent=1 // pred_check
      _
    $region11: #{tpu_custom_call.1} parent=1 // pred_check_branch
      %35 = sbr.rel (0) target = $region13
    $region12: #{tpu_custom_call.1} parent=1 // pred_region
      %37 = dma.done [#allocation3], 256
    $region13: #{tpu_custom_call.1} parent=1 // pred_fallthru
      _
    // Predicated region
    $region14: #{tpu_custom_call.1} parent=1 // pred_check
      _
    $region15: #{tpu_custom_call.1} parent=1 // pred_check_branch
      %39 = sbr.rel (0) target = $region17
    $region16: #{tpu_custom_call.1} parent=1 // pred_region
      %41 = dma.done [#allocation6], 16
    $region17: #{tpu_custom_call.1} parent=1 // pred_fallthru
      _
    %v42 = vld [vmem:[#allocation2] sm:$0xff]
    %v43 = vld [vmem:[#allocation2 + $0x8] sm:$0xff]
    %v44 = vmul.f32 %v42, %v42
    %v45 = vmul.f32 %v43, %v43
    %46 = vadd.xlane.f32.xlu0 %v44
    %v47 = vpop.xlane.xlu0 %46
    %48 = vadd.xlane.f32.xlu0 %v45
    %v49 = vpop.xlane.xlu0 %48
    %v50 = vmul.f32 %v47, 0.0078125
    %v51 = vmul.f32 %v49, 0.0078125
    %v52 = vadd.f32 %v50, 1e-05
    %v53 = vadd.f32 %v51, 1e-05
    %v54 = vrsqrt.pop %v52
    %v55 = vmul.f32 %v54, %v52
    %v56 = vmul.f32 %v55, %v54
    %v57 = vmul.f32 0.5, %v56
    %v58 = vsub.f32 1.5, %v57
    %v59 = vmul.f32 %v54, %v58
    %vm60 = vweird.f32 %v52
    %vm61 = vweird.f32 %v54
    %vm62 = vmor %vm60, %vm61
    %v63 = vsel %vm62, %v54, %v59
    %v64 = vrsqrt.pop %v53
    %v65 = vmul.f32 %v64, %v53
    %v66 = vmul.f32 %v65, %v64
    %v67 = vmul.f32 0.5, %v66
    %v68 = vsub.f32 1.5, %v67
    %v69 = vmul.f32 %v64, %v68
    %vm70 = vweird.f32 %v53
    %vm71 = vweird.f32 %v64
    %vm72 = vmor %vm70, %vm71
    %v73 = vsel %vm72, %v64, %v69
    %v74 = vmul.f32 %v42, %v63
    %v75 = vmul.f32 %v43, %v73
    %v76 = vld [vmem:[#allocation5] sm:$0x1]
    %v78 = vperm.slane %v76, 0
    %v80 = vmul.f32 %v74, %v78
    %v81 = vmul.f32 %v75, %v78
    %82 = vst [vmem:[#allocation7] sm:$0xff] %v80
    %83 = vst [vmem:[#allocation7 + $0x8] sm:$0xff] %v81
    // Predicated region
    $region18: #{tpu_custom_call.1} parent=1 // pred_check
      _
    $region19: #{tpu_custom_call.1} parent=1 // pred_check_branch
      %85 = sbr.rel (0) target = $region21
    $region20: #{tpu_custom_call.1} parent=1 // pred_region
      %87 = vsyncadd [#allocation4], 0
      %s88 = sshll.u32 [#allocation7], 4
      %s89 = int_to_ptr.vmem [resolvable:$true] %s88
      %s90 = sshll.u32 %s2, 4
      %s91 = int_to_ptr.hbm [resolvable:$true] %s90
      %96 = dma.vmem_to_hbm [thread:$0]  %s89, 256, %s91, [#allocation4], 128, 128, 8
    $region21: #{tpu_custom_call.1} parent=1 // pred_fallthru
      _
    // Predicated region
    $region22: #{tpu_custom_call.1} parent=1 // pred_check
      _
    $region23: #{tpu_custom_call.1} parent=1 // pred_check_branch
      %98 = sbr.rel (0) target = $region25
    $region24: #{tpu_custom_call.1} parent=1 // pred_region
      %100 = dma.done [#allocation4], 256
    $region25: #{tpu_custom_call.1} parent=1 // pred_fallthru
      _
    %101 = vsyncpa [#allocation3], 1
    %102 = vsyncpa [#allocation6], 1
    %103 = vsyncpa [#allocation4], 1

</llo_original>
